<compile_context>
chip_gen: v7x
topology: tpu7x:2x2x1
jax: 0.10.0
libtpu: 0.0.40
codegen_flags: <defaults>
</compile_context>

<pallas_src>
import functools
import math

import jax
import jax.numpy as jnp
from jax.experimental import pallas as pl
from jax.experimental.pallas import tpu as pltpu

N_ATOMS = 51
VMAX = 10
VMIN = -10
DELTA_Z = (VMAX - VMIN) / (N_ATOMS - 1)


def _round_up(x, m):
    return ((x + m - 1) // m) * m


# ----------------------------------------------------------------------------
# Pallas kernel: full dueling-head forward (all MXU operands bf16, f32 accum).
#   h    = ReLU(x @ [Wv1 | Wa1] + b1)                       (Bt, 512)
#   val  = h[:, :256] @ Wv2 + bv2                           (Bt, 128)  (51 padded)
#   adv  = h[:, 256:] @ Wa2 + ba2                           (Bt, 256)  (A*51 padded)
#   out  = adv + broadcast(val - mean_a(adv))               (Bt, 256)  one store
# ----------------------------------------------------------------------------
def _rainbow_kernel(x_ref, w1_ref, b1_ref, wv2_ref, bv2_ref,
                    wa2_ref, ba2_ref, rep_ref, rept_ref, o_ref,
                    *, hidden, n_actions):
    x = x_ref[...]                                            # (Bt, F_pad) bf16

    # Fused first layer (value stream || advantage stream): one N=512 MXU pass.
    h = (jnp.dot(x, w1_ref[...], preferred_element_type=jnp.float32)
         + b1_ref[...])
    h = jnp.maximum(h, 0.0).astype(jnp.bfloat16)              # (Bt, 2*hidden)
    h_val = h[:, :hidden]                                     # aligned lane slice
    h_adv = h[:, hidden:]

    # Value head: (Bt, atoms_pad), lane-dense (pad columns are zero).
    val = (jnp.dot(h_val, wv2_ref[...], preferred_element_type=jnp.float32)
           + bv2_ref[...])

    # All advantage heads fused into one lane-dense (Bt, adv_pad) matmul.
    adv = (jnp.dot(h_adv, wa2_ref[...], preferred_element_type=jnp.float32)
           + ba2_ref[...])                                    # (Bt, adv_pad)

    # Per-atom sum over actions via 0/1 replication matrix (bf16, exact):
    # adv_sum[:, i] = sum_a adv[:, a*N_ATOMS + i]  (pad cols contribute 0).
    adv_sum = jnp.dot(adv.astype(jnp.bfloat16), rept_ref[...],
                      preferred_element_type=jnp.float32)     # (Bt, atoms_pad)
    corr = val - adv_sum * (1.0 / n_actions)                  # (Bt, atoms_pad)

    # Broadcast corr across all action blocks (pad cols stay 0) and store the
    # whole (Bt, adv_pad) slab once -- fully unmasked, no o_ref re-read.
    o_ref[...] = adv + jnp.dot(corr.astype(jnp.bfloat16), rep_ref[...],
                               preferred_element_type=jnp.float32)


def rainbow_forward(x, params, n_actions):
    """x: (B, F) float; params from make_params. Returns (B, n_actions, N_ATOMS)."""
    B, F = x.shape
    hidden = params["hidden"]
    adv_pad = params["adv_pad"]
    atoms_pad = params["atoms_pad"]
    f_pad = params["f_pad"]
    adv_dim = n_actions * N_ATOMS
    assert F <= f_pad

    # bf16 activations; pad batch to 16 sublanes (bf16 packing) and features to
    # a 128-lane multiple.  Single lax.pad, skipped if already aligned.
    B_pad = max(16, _round_up(B, 16))
    x_bf = x.astype(jnp.bfloat16)
    if B_pad != B or f_pad != F:
        x_bf = jnp.pad(x_bf, ((0, B_pad - B), (0, f_pad - F)))

    # Batch grid axis: parallel -> shards across v7x's 2 TensorCores for real
    # batches; grid=(1,) at toy sizes.
    b_tile = min(B_pad, 256)
    assert B_pad % b_tile == 0
    grid = (B_pad // b_tile,)

    def full(shape):
        return pl.BlockSpec(shape, lambda i, _s=shape: (0,) * len(_s))

    kernel = functools.partial(_rainbow_kernel, hidden=hidden,
                               n_actions=n_actions)
    out2d = pl.pallas_call(
        kernel,
        out_shape=jax.ShapeDtypeStruct((B_pad, adv_pad), jnp.float32),
        grid=grid,
        in_specs=[
            pl.BlockSpec((b_tile, f_pad), lambda i: (i, 0)),   # x
            full((f_pad, 2 * hidden)),                         # w1
            full((1, 2 * hidden)),                             # b1
            full((hidden, atoms_pad)),                         # wv2
            full((1, atoms_pad)),                              # bv2
            full((hidden, adv_pad)),                           # wa2
            full((1, adv_pad)),                                # ba2
            full((atoms_pad, adv_pad)),                        # rep
            full((adv_pad, atoms_pad)),                        # rep_t
        ],
        out_specs=pl.BlockSpec((b_tile, adv_pad), lambda i: (i, 0)),
        compiler_params=pltpu.CompilerParams(
            dimension_semantics=("parallel",)),
    )(x_bf,
      params["w1"], params["b1"], params["wv2"], params["bv2"],
      params["wa2"], params["ba2"], params["rep"], params["rep_t"])

    return out2d[:B, :adv_dim].reshape(B, n_actions, N_ATOMS)


# ----------------------------------------------------------------------------
# Parameter construction (deterministic, mimics NoisyLinear.__init__ / forward;
# noise folded into effective weights, then laid out / padded / cast for the
# kernel).
# ----------------------------------------------------------------------------
def _noisy_linear_params(key, in_f, out_f, sigma_init=0.017):
    k_w, k_b, k_ew, k_eb = jax.random.split(key, 4)
    std = math.sqrt(3.0 / in_f)
    w = jax.random.uniform(k_w, (out_f, in_f), jnp.float32, -std, std)
    b = jax.random.uniform(k_b, (out_f,), jnp.float32, -std, std)
    eps_w = jax.random.normal(k_ew, (out_f, in_f), jnp.float32)
    eps_b = jax.random.normal(k_eb, (out_f,), jnp.float32)
    return w + sigma_init * eps_w, b + sigma_init * eps_b


def make_params(key, input_dim, n_actions, hidden=256):
    # The in-kernel h[:, :hidden] / h[:, hidden:] slices assume a lane-tile
    # aligned boundary.
    assert hidden % 128 == 0, "hidden must be a multiple of 128"

    k1, k2, k3, k4 = jax.random.split(key, 4)
    wv1, bv1 = _noisy_linear_params(k1, input_dim, hidden)
    wv2, bv2 = _noisy_linear_params(k2, hidden, N_ATOMS)
    wa1, ba1 = _noisy_linear_params(k3, input_dim, hidden)
    wa2, ba2 = _noisy_linear_params(k4, hidden, n_actions * N_ATOMS)

    adv_dim = n_actions * N_ATOMS
    adv_pad = _round_up(adv_dim, 128)
    atoms_pad = 128                      # lane-dense atom axis (51 -> 128)
    f_pad = _round_up(input_dim, 128)    # lane-dense feature axis

    # Fused first layer: x @ [Wv1^T | Wa1^T] -> (F_pad, 2*hidden), bf16, with
    # zero rows for the padded features.
    w1 = jnp.zeros((f_pad, 2 * hidden), jnp.float32)
    w1 = w1.at[:input_dim, :hidden].set(wv1.T)
    w1 = w1.at[:input_dim, hidden:].set(wa1.T)
    w1 = w1.astype(jnp.bfloat16)
    b1 = jnp.concatenate([bv1, ba1]).reshape(1, 2 * hidden)            # f32

    # Value head padded to lane-dense atoms_pad columns (zeros beyond 51).
    wv2_p = (jnp.zeros((hidden, atoms_pad), jnp.float32)
             .at[:, :N_ATOMS].set(wv2.T).astype(jnp.bfloat16))         # (256, 128)
    bv2_p = (jnp.zeros((1, atoms_pad), jnp.float32)
             .at[:, :N_ATOMS].set(bv2.reshape(1, N_ATOMS)))            # (1, 128) f32

    # Fused advantage heads, padded to a lane-dense multiple of 128 columns.
    wa2_p = (jnp.zeros((hidden, adv_pad), jnp.float32)
             .at[:, :adv_dim].set(wa2.T).astype(jnp.bfloat16))         # (256, 256)
    ba2_p = (jnp.zeros((1, adv_pad), jnp.float32)
             .at[:, :adv_dim].set(ba2.reshape(1, adv_dim)))            # (1, 256) f32

    # 0/1 replication matrix (exact in bf16): rep[i, a*N_ATOMS + i] = 1.
    #   corr @ rep    -> corr broadcast to every action block (pad cols = 0)
    #   adv  @ rep.T  -> per-atom sum over actions (pad rows/cols = 0)
    eye = jnp.eye(N_ATOMS, dtype=jnp.float32)
    rep = jnp.zeros((atoms_pad, adv_pad), jnp.float32)
    for a in range(n_actions):
        rep = rep.at[:N_ATOMS, a * N_ATOMS:(a + 1) * N_ATOMS].set(eye)

    return {
        "w1": w1, "b1": b1,
        "wv2": wv2_p, "bv2": bv2_p,
        "wa2": wa2_p, "ba2": ba2_p,
        "rep": rep.astype(jnp.bfloat16),
        "rep_t": rep.T.astype(jnp.bfloat16),
        "hidden": hidden, "adv_pad": adv_pad,
        "atoms_pad": atoms_pad, "f_pad": f_pad,
    }


# Pure-JAX f32 reference (mirrors the PyTorch forward) on the same effective
# (bf16-stored) weights.
def reference_forward(x, params, n_actions):
    hidden = params["hidden"]
    f_pad = params["f_pad"]
    adv_dim = n_actions * N_ATOMS
    B, F = x.shape
    fx = jnp.pad(x.astype(jnp.float32), ((0, 0), (0, f_pad - F)))
    h = jnp.maximum(fx @ params["w1"].astype(jnp.float32) + params["b1"], 0.0)
    h_val, h_adv = h[:, :hidden], h[:, hidden:]
    val = (h_val @ params["wv2"].astype(jnp.float32)
           + params["bv2"])[:, :N_ATOMS].reshape(-1, 1, N_ATOMS)
    adv = (h_adv @ params["wa2"].astype(jnp.float32) + params["ba2"])[:, :adv_dim]
    adv = adv.reshape(-1, n_actions, N_ATOMS)
    adv_mean = adv.mean(axis=1, keepdims=True)
    return val + (adv - adv_mean)


if __name__ == "__main__":
    BATCH = 2
    INPUT_DIM = 32     # input_shape[0]
    N_ACTIONS = 5

    key = jax.random.PRNGKey(0)
    k_x, k_p = jax.random.split(key)
    x = jax.random.normal(k_x, (BATCH, INPUT_DIM), jnp.float32)
    params = make_params(k_p, INPUT_DIM, N_ACTIONS)

    out = rainbow_forward(x, params, N_ACTIONS)
    out = jax.block_until_ready(out)

    ref = reference_forward(x, params, N_ACTIONS)
    assert out.shape == (BATCH, N_ACTIONS, N_ATOMS)
    # bf16 activations/weights in the kernel vs f32 reference -> loosened tol.
    assert jnp.allclose(out, ref, atol=5e-2, rtol=5e-2), "mismatch vs reference"

    print("KERNEL_OK")
</pallas_src>

<mosaic_0001>
module attributes {stable_mosaic.version = 11 : i64} {
  func.func @_rainbow_kernel(%arg0: i32, %arg1: memref<16x128xbf16, #tpu.memory_space<vmem>>, %arg2: memref<128x512xbf16, #tpu.memory_space<vmem>>, %arg3: memref<1x512xf32, #tpu.memory_space<vmem>>, %arg4: memref<256x128xbf16, #tpu.memory_space<vmem>>, %arg5: memref<1x128xf32, #tpu.memory_space<vmem>>, %arg6: memref<256x256xbf16, #tpu.memory_space<vmem>>, %arg7: memref<1x256xf32, #tpu.memory_space<vmem>>, %arg8: memref<128x256xbf16, #tpu.memory_space<vmem>>, %arg9: memref<256x128xbf16, #tpu.memory_space<vmem>>, %arg10: memref<16x256xf32, #tpu.memory_space<vmem>>) attributes {dimension_semantics = [#tpu.dimension_semantics<parallel>], iteration_bounds = array<i64: 1>, scalar_prefetch = 0 : i64, scratch_operands = 0 : i64, tpu.core_type = #tpu.core_type<tc>, window_params = [{transform_indices = @transform_0, window_bounds = array<i64: 16, 128>}, {pipeline_mode = #tpu.pipeline_mode<synchronous>, transform_indices = @transform_1, window_bounds = array<i64: 128, 512>}, {pipeline_mode = #tpu.pipeline_mode<synchronous>, transform_indices = @transform_2, window_bounds = array<i64: 1, 512>}, {pipeline_mode = #tpu.pipeline_mode<synchronous>, transform_indices = @transform_3, window_bounds = array<i64: 256, 128>}, {pipeline_mode = #tpu.pipeline_mode<synchronous>, transform_indices = @transform_4, window_bounds = array<i64: 1, 128>}, {pipeline_mode = #tpu.pipeline_mode<synchronous>, transform_indices = @transform_5, window_bounds = array<i64: 256, 256>}, {pipeline_mode = #tpu.pipeline_mode<synchronous>, transform_indices = @transform_6, window_bounds = array<i64: 1, 256>}, {pipeline_mode = #tpu.pipeline_mode<synchronous>, transform_indices = @transform_7, window_bounds = array<i64: 128, 256>}, {pipeline_mode = #tpu.pipeline_mode<synchronous>, transform_indices = @transform_8, window_bounds = array<i64: 256, 128>}, {transform_indices = @transform_9, window_bounds = array<i64: 16, 256>}]} {
    %c0 = arith.constant 0 : index
    %c0_0 = arith.constant 0 : index
    %0 = vector.load %arg1[%c0, %c0_0] : memref<16x128xbf16, #tpu.memory_space<vmem>>, vector<16x128xbf16>
    %c0_1 = arith.constant 0 : index
    %c0_2 = arith.constant 0 : index
    %1 = vector.load %arg2[%c0_1, %c0_2] : memref<128x512xbf16, #tpu.memory_space<vmem>>, vector<128x512xbf16>
    %cst = arith.constant dense<0.000000e+00> : vector<16x512xf32>
    %2 = tpu.matmul %0, %1, %cst {dimension_numbers = #tpu.dot_dimension_numbers<[1], [0], [0], [1], [0, 0, 1, 1], [], []>} : vector<16x128xbf16>, vector<128x512xbf16>, vector<16x512xf32> -> vector<16x512xf32>
    %c0_3 = arith.constant 0 : index
    %c0_4 = arith.constant 0 : index
    %3 = vector.load %arg3[%c0_3, %c0_4] : memref<1x512xf32, #tpu.memory_space<vmem>>, vector<1x512xf32>
    %4 = vector.broadcast %3 : vector<1x512xf32> to vector<16x512xf32>
    %5 = arith.addf %2, %4 : vector<16x512xf32>
    %cst_5 = arith.constant 0.000000e+00 : f32
    %6 = vector.broadcast %cst_5 : f32 to vector<16x512xf32>
    %7 = arith.maximumf %5, %6 : vector<16x512xf32>
    %8 = arith.truncf %7 : vector<16x512xf32> to vector<16x512xbf16>
    %9 = vector.extract_strided_slice %8 {offsets = [0, 0], sizes = [16, 256], strides = [1, 1]} : vector<16x512xbf16> to vector<16x256xbf16>
    %10 = vector.extract_strided_slice %8 {offsets = [0, 256], sizes = [16, 256], strides = [1, 1]} : vector<16x512xbf16> to vector<16x256xbf16>
    %c0_6 = arith.constant 0 : index
    %c0_7 = arith.constant 0 : index
    %11 = vector.load %arg4[%c0_6, %c0_7] : memref<256x128xbf16, #tpu.memory_space<vmem>>, vector<256x128xbf16>
    %cst_8 = arith.constant dense<0.000000e+00> : vector<16x128xf32>
    %12 = tpu.matmul %9, %11, %cst_8 {dimension_numbers = #tpu.dot_dimension_numbers<[1], [0], [0], [1], [0, 0, 1, 1], [], []>} : vector<16x256xbf16>, vector<256x128xbf16>, vector<16x128xf32> -> vector<16x128xf32>
    %c0_9 = arith.constant 0 : index
    %c0_10 = arith.constant 0 : index
    %13 = vector.load %arg5[%c0_9, %c0_10] : memref<1x128xf32, #tpu.memory_space<vmem>>, vector<1x128xf32>
    %14 = vector.broadcast %13 : vector<1x128xf32> to vector<16x128xf32>
    %15 = arith.addf %12, %14 : vector<16x128xf32>
    %c0_11 = arith.constant 0 : index
    %c0_12 = arith.constant 0 : index
    %16 = vector.load %arg6[%c0_11, %c0_12] : memref<256x256xbf16, #tpu.memory_space<vmem>>, vector<256x256xbf16>
    %cst_13 = arith.constant dense<0.000000e+00> : vector<16x256xf32>
    %17 = tpu.matmul %10, %16, %cst_13 {dimension_numbers = #tpu.dot_dimension_numbers<[1], [0], [0], [1], [0, 0, 1, 1], [], []>} : vector<16x256xbf16>, vector<256x256xbf16>, vector<16x256xf32> -> vector<16x256xf32>
    %c0_14 = arith.constant 0 : index
    %c0_15 = arith.constant 0 : index
    %18 = vector.load %arg7[%c0_14, %c0_15] : memref<1x256xf32, #tpu.memory_space<vmem>>, vector<1x256xf32>
    %19 = vector.broadcast %18 : vector<1x256xf32> to vector<16x256xf32>
    %20 = arith.addf %17, %19 : vector<16x256xf32>
    %21 = arith.truncf %20 : vector<16x256xf32> to vector<16x256xbf16>
    %c0_16 = arith.constant 0 : index
    %c0_17 = arith.constant 0 : index
    %22 = vector.load %arg9[%c0_16, %c0_17] : memref<256x128xbf16, #tpu.memory_space<vmem>>, vector<256x128xbf16>
    %cst_18 = arith.constant dense<0.000000e+00> : vector<16x128xf32>
    %23 = tpu.matmul %21, %22, %cst_18 {dimension_numbers = #tpu.dot_dimension_numbers<[1], [0], [0], [1], [0, 0, 1, 1], [], []>} : vector<16x256xbf16>, vector<256x128xbf16>, vector<16x128xf32> -> vector<16x128xf32>
    %cst_19 = arith.constant 2.000000e-01 : f32
    %24 = vector.broadcast %cst_19 : f32 to vector<16x128xf32>
    %25 = arith.mulf %23, %24 : vector<16x128xf32>
    %26 = arith.subf %15, %25 : vector<16x128xf32>
    %27 = arith.truncf %26 : vector<16x128xf32> to vector<16x128xbf16>
    %c0_20 = arith.constant 0 : index
    %c0_21 = arith.constant 0 : index
    %28 = vector.load %arg8[%c0_20, %c0_21] : memref<128x256xbf16, #tpu.memory_space<vmem>>, vector<128x256xbf16>
    %cst_22 = arith.constant dense<0.000000e+00> : vector<16x256xf32>
    %29 = tpu.matmul %27, %28, %cst_22 {dimension_numbers = #tpu.dot_dimension_numbers<[1], [0], [0], [1], [0, 0, 1, 1], [], []>} : vector<16x128xbf16>, vector<128x256xbf16>, vector<16x256xf32> -> vector<16x256xf32>
    %30 = arith.addf %20, %29 : vector<16x256xf32>
    %c0_23 = arith.constant 0 : index
    %c0_24 = arith.constant 0 : index
    %31 = vector.load %arg10[%c0_23, %c0_24] : memref<16x256xf32, #tpu.memory_space<vmem>>, vector<16x256xf32>
    tpu.vector_store %arg10[%c0_23, %c0_24], %30 {strides = array<i32>} : memref<16x256xf32, #tpu.memory_space<vmem>>, vector<16x256xf32>,
    return
  }
  func.func @transform_0(%arg0: i32) -> (i32, i32) {
    %c0_i32 = arith.constant 0 : i32
    %c0_i32_0 = arith.constant 0 : i32
    return %arg0, %c0_i32 : i32, i32
  }
  func.func @transform_1(%arg0: i32) -> (i32, i32) {
    %c0_i32 = arith.constant 0 : i32
    %c0_i32_0 = arith.constant 0 : i32
    %c0_i32_1 = arith.constant 0 : i32
    return %c0_i32, %c0_i32_0 : i32, i32
  }
  func.func @transform_2(%arg0: i32) -> (i32, i32) {
    %c0_i32 = arith.constant 0 : i32
    %c0_i32_0 = arith.constant 0 : i32
    %c0_i32_1 = arith.constant 0 : i32
    return %c0_i32, %c0_i32_0 : i32, i32
  }
  func.func @transform_3(%arg0: i32) -> (i32, i32) {
    %c0_i32 = arith.constant 0 : i32
    %c0_i32_0 = arith.constant 0 : i32
    %c0_i32_1 = arith.constant 0 : i32
    return %c0_i32, %c0_i32_0 : i32, i32
  }
  func.func @transform_4(%arg0: i32) -> (i32, i32) {
    %c0_i32 = arith.constant 0 : i32
    %c0_i32_0 = arith.constant 0 : i32
    %c0_i32_1 = arith.constant 0 : i32
    return %c0_i32, %c0_i32_0 : i32, i32
  }
  func.func @transform_5(%arg0: i32) -> (i32, i32) {
    %c0_i32 = arith.constant 0 : i32
    %c0_i32_0 = arith.constant 0 : i32
    %c0_i32_1 = arith.constant 0 : i32
    return %c0_i32, %c0_i32_0 : i32, i32
  }
  func.func @transform_6(%arg0: i32) -> (i32, i32) {
    %c0_i32 = arith.constant 0 : i32
    %c0_i32_0 = arith.constant 0 : i32
    %c0_i32_1 = arith.constant 0 : i32
    return %c0_i32, %c0_i32_0 : i32, i32
  }
  func.func @transform_7(%arg0: i32) -> (i32, i32) {
    %c0_i32 = arith.constant 0 : i32
    %c0_i32_0 = arith.constant 0 : i32
    %c0_i32_1 = arith.constant 0 : i32
    return %c0_i32, %c0_i32_0 : i32, i32
  }
  func.func @transform_8(%arg0: i32) -> (i32, i32) {
    %c0_i32 = arith.constant 0 : i32
    %c0_i32_0 = arith.constant 0 : i32
    %c0_i32_1 = arith.constant 0 : i32
    return %c0_i32, %c0_i32_0 : i32, i32
  }
  func.func @transform_9(%arg0: i32) -> (i32, i32) {
    %c0_i32 = arith.constant 0 : i32
    %c0_i32_0 = arith.constant 0 : i32
    return %arg0, %c0_i32 : i32, i32
  }
}

</mosaic_0001>

<llo_original>
// kernel: tpu_custom_call.1
$region0: #{tpu_custom_call.1}
  #allocation0 [shape = 'u32[]', space=smem, size = 0x4, offset = 0x4, fixed_abs, tag = 'smem constant byte address 0x4 - core index']
  #allocation1 [shape = 'u32[144,128]{1,0:T(1,128)}', space=vmem, size = 0x12000, scoped, tag = 'internal scratch']
  %s0 = inlined_call_operand.hbm [shape: bf16[16,128], index: 0, kind: input, shape index: {}]
  %s1 = inlined_call_operand.hbm [shape: bf16[128,512], index: 1, kind: input, shape index: {}]
  %s2 = inlined_call_operand.vmem [shape: f32[1,512], index: 2, kind: input, shape index: {}]
  %s3 = inlined_call_operand.hbm [shape: bf16[256,128], index: 3, kind: input, shape index: {}]
  %s4 = inlined_call_operand.vmem [shape: f32[1,128], index: 4, kind: input, shape index: {}]
  %s5 = inlined_call_operand.hbm [shape: bf16[256,256], index: 5, kind: input, shape index: {}]
  %s6 = inlined_call_operand.vmem [shape: f32[1,256], index: 6, kind: input, shape index: {}]
  %s7 = inlined_call_operand.hbm [shape: bf16[128,256], index: 7, kind: input, shape index: {}]
  %s8 = inlined_call_operand.hbm [shape: bf16[256,128], index: 8, kind: input, shape index: {}]
  %s9 = inlined_call_operand.hbm [shape: f32[16,256], index: 9, kind: output, shape index: {}]
  %s10 = sld [smem:[#allocation0]]
  $region70: #{tpu_custom_call.1} parent=0
    _
  %s12 = ssub.s32 1, %s10
  %s13 = scalar_select 0, %s12, %s10
  $region1: #{tpu_custom_call.1} parent=0
    #allocation2 [shape = 'u8[4096]{0}', space=vmem, size = 0x1000, scoped, tag = 'input window, operand 0, single buffered']
    #allocation3 [shape = 's32[1]{0}', space=sflag, size = 0x4, scoped, tag = 'scoped memory for tpu_custom_call.1']
    #allocation4 [shape = 's32[1]{0}', space=sflag, size = 0x4, scoped, tag = 'scoped memory for tpu_custom_call.1']
    #allocation5 [shape = 'u8[131072]{0}', space=vmem, size = 0x20000, scoped, tag = 'input window, operand 1, single buffered']
    #allocation6 [shape = 's32[1]{0}', space=sflag, size = 0x4, scoped, tag = 'scoped memory for tpu_custom_call.1']
    #allocation7 [shape = 'u8[65536]{0}', space=vmem, size = 0x10000, scoped, tag = 'input window, operand 3, single buffered']
    #allocation8 [shape = 'u8[131072]{0}', space=vmem, size = 0x20000, scoped, tag = 'input window, operand 5, single buffered']
    #allocation9 [shape = 's32[1]{0}', space=sflag, size = 0x4, scoped, tag = 'scoped memory for tpu_custom_call.1']
    #allocation10 [shape = 'u8[65536]{0}', space=vmem, size = 0x10000, scoped, tag = 'input window, operand 7, single buffered']
    #allocation11 [shape = 'u8[65536]{0}', space=vmem, size = 0x10000, scoped, tag = 'input window, operand 8, single buffered']
    #allocation12 [shape = 's32[1]{0}', space=sflag, size = 0x4, scoped, tag = 'scoped memory for tpu_custom_call.1']
    #allocation13 [shape = 'u8[16384]{0}', space=vmem, size = 0x4000, scoped, tag = 'output window, operand 0, single buffered']
    %14 = vsyncpa [#allocation3], 0
    %15 = vsyncpa [#allocation6], 0
    %16 = vsyncpa [#allocation9], 0
    %17 = vsyncpa [#allocation12], 0
    %18 = vsyncpa [#allocation4], 0
    // Predicated region
    $region2: #{tpu_custom_call.1} parent=1 // pred_check
      _
    $region3: #{tpu_custom_call.1} parent=1 // pred_check_branch
      %20 = sbr.rel (0) target = $region5
    $region4: #{tpu_custom_call.1} parent=1 // pred_region
      %s22 = ssub.s32 128, 128
      %23 = vsyncadd [#allocation3], %s22
      %s24 = sshll.u32 [#allocation2], 4
      %s25 = int_to_ptr.vmem [resolvable:$true] %s24
      %30 = dma.hbm_to_vmem [thread:$0]  %s0, 128, %s25, [#allocation3], 64, 64, 4
    $region5: #{tpu_custom_call.1} parent=1 // pred_fallthru
      _
    // Predicated region
    $region6: #{tpu_custom_call.1} parent=1 // pred_check
      _
    $region7: #{tpu_custom_call.1} parent=1 // pred_check_branch
      %32 = sbr.rel (0) target = $region9
    $region8: #{tpu_custom_call.1} parent=1 // pred_region
      %s34 = ssub.s32 4096, 4096
      %35 = vsyncadd [#allocation6], %s34
      %s36 = sshll.u32 [#allocation5], 4
      %s37 = int_to_ptr.vmem [resolvable:$true] %s36
      %42 = dma.hbm_to_vmem [thread:$0]  %s1, 4096, %s37, [#allocation6], 256, 256, 16
    $region9: #{tpu_custom_call.1} parent=1 // pred_fallthru
      _
    // Predicated region
    $region10: #{tpu_custom_call.1} parent=1 // pred_check
      _
    $region11: #{tpu_custom_call.1} parent=1 // pred_check_branch
      %44 = sbr.rel (0) target = $region13
    $region12: #{tpu_custom_call.1} parent=1 // pred_region
      _
    $region13: #{tpu_custom_call.1} parent=1 // pred_fallthru
      _
    // Predicated region
    $region14: #{tpu_custom_call.1} parent=1 // pred_check
      _
    $region15: #{tpu_custom_call.1} parent=1 // pred_check_branch
      %46 = sbr.rel (0) target = $region17
    $region16: #{tpu_custom_call.1} parent=1 // pred_region
      %s48 = ssub.s32 2048, 2048
      %49 = vsyncadd [#allocation6], %s48
      %s50 = sshll.u32 [#allocation7], 4
      %s51 = int_to_ptr.vmem [resolvable:$true] %s50
      %56 = dma.hbm_to_vmem [thread:$0]  %s3, 2048, %s51, [#allocation6], 64, 64, 4
    $region17: #{tpu_custom_call.1} parent=1 // pred_fallthru
      _
    // Predicated region
    $region18: #{tpu_custom_call.1} parent=1 // pred_check
      _
    $region19: #{tpu_custom_call.1} parent=1 // pred_check_branch
      %58 = sbr.rel (0) target = $region21
    $region20: #{tpu_custom_call.1} parent=1 // pred_region
      _
    $region21: #{tpu_custom_call.1} parent=1 // pred_fallthru
      _
    // Predicated region
    $region22: #{tpu_custom_call.1} parent=1 // pred_check
      _
    $region23: #{tpu_custom_call.1} parent=1 // pred_check_branch
      %60 = sbr.rel (0) target = $region25
    $region24: #{tpu_custom_call.1} parent=1 // pred_region
      %s62 = ssub.s32 4096, 4096
      %63 = vsyncadd [#allocation9], %s62
      %s64 = sshll.u32 [#allocation8], 4
      %s65 = int_to_ptr.vmem [resolvable:$true] %s64
      %70 = dma.hbm_to_vmem [thread:$0]  %s5, 4096, %s65, [#allocation9], 128, 128, 8
    $region25: #{tpu_custom_call.1} parent=1 // pred_fallthru
      _
    // Predicated region
    $region26: #{tpu_custom_call.1} parent=1 // pred_check
      _
    $region27: #{tpu_custom_call.1} parent=1 // pred_check_branch
      %72 = sbr.rel (0) target = $region29
    $region28: #{tpu_custom_call.1} parent=1 // pred_region
      _
    $region29: #{tpu_custom_call.1} parent=1 // pred_fallthru
      _
    // Predicated region
    $region30: #{tpu_custom_call.1} parent=1 // pred_check
      _
    $region31: #{tpu_custom_call.1} parent=1 // pred_check_branch
      %74 = sbr.rel (0) target = $region33
    $region32: #{tpu_custom_call.1} parent=1 // pred_region
      %s76 = ssub.s32 2048, 2048
      %77 = vsyncadd [#allocation9], %s76
      %s78 = sshll.u32 [#allocation10], 4
      %s79 = int_to_ptr.vmem [resolvable:$true] %s78
      %84 = dma.hbm_to_vmem [thread:$0]  %s7, 2048, %s79, [#allocation9], 128, 128, 8
    $region33: #{tpu_custom_call.1} parent=1 // pred_fallthru
      _
    // Predicated region
    $region34: #{tpu_custom_call.1} parent=1 // pred_check
      _
    $region35: #{tpu_custom_call.1} parent=1 // pred_check_branch
      %86 = sbr.rel (0) target = $region37
    $region36: #{tpu_custom_call.1} parent=1 // pred_region
      %s88 = ssub.s32 2048, 2048
      %89 = vsyncadd [#allocation12], %s88
      %s90 = sshll.u32 [#allocation11], 4
      %s91 = int_to_ptr.vmem [resolvable:$true] %s90
      %96 = dma.hbm_to_vmem [thread:$0]  %s8, 2048, %s91, [#allocation12], 64, 64, 4
    $region37: #{tpu_custom_call.1} parent=1 // pred_fallthru
      _
    // Predicated region
    $region38: #{tpu_custom_call.1} parent=1 // pred_check
      _
    $region39: #{tpu_custom_call.1} parent=1 // pred_check_branch
      %98 = sbr.rel (0) target = $region41
    $region40: #{tpu_custom_call.1} parent=1 // pred_region
      %99 = dma.done [#allocation3], 128
    $region41: #{tpu_custom_call.1} parent=1 // pred_fallthru
      _
    // Predicated region
    $region42: #{tpu_custom_call.1} parent=1 // pred_check
      _
    $region43: #{tpu_custom_call.1} parent=1 // pred_check_branch
      %101 = sbr.rel (0) target = $region45
    $region44: #{tpu_custom_call.1} parent=1 // pred_region
      %102 = dma.done [#allocation6], 4096
    $region45: #{tpu_custom_call.1} parent=1 // pred_fallthru
      _
    // Predicated region
    $region46: #{tpu_custom_call.1} parent=1 // pred_check
      _
    $region47: #{tpu_custom_call.1} parent=1 // pred_check_branch
      %104 = sbr.rel (0) target = $region49
    $region48: #{tpu_custom_call.1} parent=1 // pred_region
      %105 = dma.done [#allocation6], 2048
    $region49: #{tpu_custom_call.1} parent=1 // pred_fallthru
      _
    // Predicated region
    $region50: #{tpu_custom_call.1} parent=1 // pred_check
      _
    $region51: #{tpu_custom_call.1} parent=1 // pred_check_branch
      %107 = sbr.rel (0) target = $region53
    $region52: #{tpu_custom_call.1} parent=1 // pred_region
      %108 = dma.done [#allocation9], 4096
    $region53: #{tpu_custom_call.1} parent=1 // pred_fallthru
      _
    // Predicated region
    $region54: #{tpu_custom_call.1} parent=1 // pred_check
      _
    $region55: #{tpu_custom_call.1} parent=1 // pred_check_branch
      %110 = sbr.rel (0) target = $region57
    $region56: #{tpu_custom_call.1} parent=1 // pred_region
      %111 = dma.done [#allocation9], 2048
    $region57: #{tpu_custom_call.1} parent=1 // pred_fallthru
      _
    // Predicated region
    $region58: #{tpu_custom_call.1} parent=1 // pred_check
      _
    $region59: #{tpu_custom_call.1} parent=1 // pred_check_branch
      %113 = sbr.rel (0) target = $region61
    $region60: #{tpu_custom_call.1} parent=1 // pred_region
      %114 = dma.done [#allocation12], 2048
    $region61: #{tpu_custom_call.1} parent=1 // pred_fallthru
      _
    %v116 = vld [vmem:[#allocation2] sm:$0xf]
    %v117 = vld [vmem:[#allocation2 + $0x4] sm:$0xf]
    %v118 = vld [vmem:[#allocation5] sm:$0xff]
    %v119 = vld [vmem:[#allocation5 + $0x8] sm:$0xff]
    %v120 = vld [vmem:[#allocation5 + $0x10] sm:$0xff]
    %v121 = vld [vmem:[#allocation5 + $0x18] sm:$0xff]
    %v122 = vld [vmem:[#allocation5 + $0x20] sm:$0xff]
    %v123 = vld [vmem:[#allocation5 + $0x28] sm:$0xff]
    %v124 = vld [vmem:[#allocation5 + $0x30] sm:$0xff]
    %v125 = vld [vmem:[#allocation5 + $0x38] sm:$0xff]
    %v126 = vld [vmem:[#allocation5 + $0x40] sm:$0xff]
    %v127 = vld [vmem:[#allocation5 + $0x48] sm:$0xff]
    %v128 = vld [vmem:[#allocation5 + $0x50] sm:$0xff]
    %v129 = vld [vmem:[#allocation5 + $0x58] sm:$0xff]
    %v130 = vld [vmem:[#allocation5 + $0x60] sm:$0xff]
    %v131 = vld [vmem:[#allocation5 + $0x68] sm:$0xff]
    %v132 = vld [vmem:[#allocation5 + $0x70] sm:$0xff]
    %v133 = vld [vmem:[#allocation5 + $0x78] sm:$0xff]
    %v134 = vld [vmem:[#allocation5 + $0x80] sm:$0xff]
    %v135 = vld [vmem:[#allocation5 + $0x88] sm:$0xff]
    %v136 = vld [vmem:[#allocation5 + $0x90] sm:$0xff]
    %v137 = vld [vmem:[#allocation5 + $0x98] sm:$0xff]
    %v138 = vld [vmem:[#allocation5 + $0xa0] sm:$0xff]
    %v139 = vld [vmem:[#allocation5 + $0xa8] sm:$0xff]
    %v140 = vld [vmem:[#allocation5 + $0xb0] sm:$0xff]
    %v141 = vld [vmem:[#allocation5 + $0xb8] sm:$0xff]
    %v142 = vld [vmem:[#allocation5 + $0xc0] sm:$0xff]
    %v143 = vld [vmem:[#allocation5 + $0xc8] sm:$0xff]
    %v144 = vld [vmem:[#allocation5 + $0xd0] sm:$0xff]
    %v145 = vld [vmem:[#allocation5 + $0xd8] sm:$0xff]
    %v146 = vld [vmem:[#allocation5 + $0xe0] sm:$0xff]
    %v147 = vld [vmem:[#allocation5 + $0xe8] sm:$0xff]
    %v148 = vld [vmem:[#allocation5 + $0xf0] sm:$0xff]
    %v149 = vld [vmem:[#allocation5 + $0xf8] sm:$0xff]
    %v150 = vld [vmem:[%s2] sm:$0xf]
    %v152 = vlaneseq
    %v153 = vshrl.u32 %v152, 7
    %v154 = vsub.s32 0, %v153
    %v155 = vrot.slane %v150, %v154
    %v156 = vlaneseq
    %v157 = vshrl.u32 %v156, 7
    %v158 = vsub.s32 1, %v157
    %v159 = vrot.slane %v150, %v158
    %v160 = vlaneseq
    %v161 = vshrl.u32 %v160, 7
    %v162 = vsub.s32 2, %v161
    %v163 = vrot.slane %v150, %v162
    %v164 = vlaneseq
    %v165 = vshrl.u32 %v164, 7
    %v166 = vsub.s32 3, %v165
    %v167 = vrot.slane %v150, %v166
    %v174 = vunpack.c.l.b16 %v116
    %v175 = vunpack.c.l.b16 %v117
    %v176 = vpack.c.b16 %v175, %v174
    %v210 = vunpack.c.l.b16 %v118
    %v211 = vunpack.c.h.b16 %v118
    %v212 = vunpack.c.l.b16 %v119
    %v213 = vunpack.c.h.b16 %v119
    %v214 = vunpack.c.l.b16 %v120
    %v215 = vunpack.c.h.b16 %v120
    %v216 = vunpack.c.l.b16 %v121
    %v217 = vunpack.c.h.b16 %v121
    %v218 = vunpack.c.l.b16 %v122
    %v219 = vunpack.c.h.b16 %v122
    %v220 = vunpack.c.l.b16 %v123
    %v221 = vunpack.c.h.b16 %v123
    %v222 = vunpack.c.l.b16 %v124
    %v223 = vunpack.c.h.b16 %v124
    %v224 = vunpack.c.l.b16 %v125
    %v225 = vunpack.c.h.b16 %v125
    %v226 = vunpack.c.l.b16 %v126
    %v227 = vunpack.c.h.b16 %v126
    %v228 = vunpack.c.l.b16 %v127
    %v229 = vunpack.c.h.b16 %v127
    %v230 = vunpack.c.l.b16 %v128
    %v231 = vunpack.c.h.b16 %v128
    %v232 = vunpack.c.l.b16 %v129
    %v233 = vunpack.c.h.b16 %v129
    %v234 = vunpack.c.l.b16 %v130
    %v235 = vunpack.c.h.b16 %v130
    %v236 = vunpack.c.l.b16 %v131
    %v237 = vunpack.c.h.b16 %v131
    %v238 = vunpack.c.l.b16 %v132
    %v239 = vunpack.c.h.b16 %v132
    %v240 = vunpack.c.l.b16 %v133
    %v241 = vunpack.c.h.b16 %v133
    %v242 = vunpack.c.l.b16 %v134
    %v243 = vunpack.c.h.b16 %v134
    %v244 = vunpack.c.l.b16 %v135
    %v245 = vunpack.c.h.b16 %v135
    %v246 = vunpack.c.l.b16 %v136
    %v247 = vunpack.c.h.b16 %v136
    %v248 = vunpack.c.l.b16 %v137
    %v249 = vunpack.c.h.b16 %v137
    %v250 = vunpack.c.l.b16 %v138
    %v251 = vunpack.c.h.b16 %v138
    %v252 = vunpack.c.l.b16 %v139
    %v253 = vunpack.c.h.b16 %v139
    %v254 = vunpack.c.l.b16 %v140
    %v255 = vunpack.c.h.b16 %v140
    %v256 = vunpack.c.l.b16 %v141
    %v257 = vunpack.c.h.b16 %v141
    %v258 = vunpack.c.l.b16 %v142
    %v259 = vunpack.c.h.b16 %v142
    %v260 = vunpack.c.l.b16 %v143
    %v261 = vunpack.c.h.b16 %v143
    %v262 = vunpack.c.l.b16 %v144
    %v263 = vunpack.c.h.b16 %v144
    %v264 = vunpack.c.l.b16 %v145
    %v265 = vunpack.c.h.b16 %v145
    %v266 = vunpack.c.l.b16 %v146
    %v267 = vunpack.c.h.b16 %v146
    %v268 = vunpack.c.l.b16 %v147
    %v269 = vunpack.c.h.b16 %v147
    %v270 = vunpack.c.l.b16 %v148
    %v271 = vunpack.c.h.b16 %v148
    %v272 = vunpack.c.l.b16 %v149
    %v273 = vunpack.c.h.b16 %v149
    %v274 = vpack.c.b16 %v214, %v210
    %v275 = vpack.c.b16 %v215, %v211
    %v276 = vpack.c.b16 %v216, %v212
    %v277 = vpack.c.b16 %v217, %v213
    %v278 = vpack.c.b16 %v222, %v218
    %v279 = vpack.c.b16 %v223, %v219
    %v280 = vpack.c.b16 %v224, %v220
    %v281 = vpack.c.b16 %v225, %v221
    %v282 = vpack.c.b16 %v230, %v226
    %v283 = vpack.c.b16 %v231, %v227
    %v284 = vpack.c.b16 %v232, %v228
    %v285 = vpack.c.b16 %v233, %v229
    %v286 = vpack.c.b16 %v238, %v234
    %v287 = vpack.c.b16 %v239, %v235
    %v288 = vpack.c.b16 %v240, %v236
    %v289 = vpack.c.b16 %v241, %v237
    %v290 = vpack.c.b16 %v246, %v242
    %v291 = vpack.c.b16 %v247, %v243
    %v292 = vpack.c.b16 %v248, %v244
    %v293 = vpack.c.b16 %v249, %v245
    %v294 = vpack.c.b16 %v254, %v250
    %v295 = vpack.c.b16 %v255, %v251
    %v296 = vpack.c.b16 %v256, %v252
    %v297 = vpack.c.b16 %v257, %v253
    %v298 = vpack.c.b16 %v262, %v258
    %v299 = vpack.c.b16 %v263, %v259
    %v300 = vpack.c.b16 %v264, %v260
    %v301 = vpack.c.b16 %v265, %v261
    %v302 = vpack.c.b16 %v270, %v266
    %v303 = vpack.c.b16 %v271, %v267
    %v304 = vpack.c.b16 %v272, %v268
    %v305 = vpack.c.b16 %v273, %v269
    %338 = vmatprep.subr.bf16.mxu0 %v275
    %339 = vmatpush1.bf16.msra.mxu0 %v274
    %340 = vmatprep.subr.bf16.mxu0 %v279
    %341 = vmatpush1.bf16.msra.mxu0 %v278
    %342 = vmatprep.subr.bf16.mxu0 %v283
    %343 = vmatpush1.bf16.msra.mxu0 %v282
    %344 = vmatprep.subr.bf16.mxu0 %v287
    %345 = vmatpush1.bf16.msra.mxu0 %v286
    %346 = vmatprep.subr.bf16.mxu0 %v291
    %347 = vmatpush1.bf16.msra.mxu0 %v290
    %348 = vmatprep.subr.bf16.mxu0 %v295
    %349 = vmatpush1.bf16.msra.mxu0 %v294
    %350 = vmatprep.subr.bf16.mxu0 %v299
    %351 = vmatpush1.bf16.msra.mxu0 %v298
    %352 = vmatprep.subr.bf16.mxu0 %v303
    %353 = vmatpush1.bf16.msra.mxu0 %v302
    %354 = vmatprep.subr.bf16.mxu0 0
    %355 = vmatpush1.bf16.msra.mxu0 0
    %356 = vmatprep.subr.bf16.mxu0 0
    %357 = vmatpush1.bf16.msra.mxu0 0
    %358 = vmatprep.subr.bf16.mxu0 0
    %359 = vmatpush1.bf16.msra.mxu0 0
    %360 = vmatprep.subr.bf16.mxu0 0
    %361 = vmatpush1.bf16.msra.mxu0 0
    %362 = vmatprep.subr.bf16.mxu0 0
    %363 = vmatpush1.bf16.msra.mxu0 0
    %364 = vmatprep.subr.bf16.mxu0 0
    %365 = vmatpush1.bf16.msra.mxu0 0
    %366 = vmatprep.subr.bf16.mxu0 0
    %367 = vmatpush1.bf16.msra.mxu0 0
    %368 = vmatprep.subr.bf16.mxu0 0
    %369 = vmatpush1.bf16.msra.mxu0 0
    %370 = vmatprep.mubr.bf16.mxu0 0
    %371 = vmatmul.mubr.bf16.gmra.mrb[0].mxu0 %v176
    %v372 = vpop.f32.mrb[0].mxu0
    %v373 = vadd.f32 %v155, %v372
    %v374 = vpop.f32.mrb[0].mxu0
    %v375 = vadd.f32 %v159, %v374
    %v376 = vpop.f32.mrb[0].mxu0
    %v377 = vadd.f32 %v155, %v376
    %v378 = vpop.f32.mrb[0].mxu0
    %v379 = vadd.f32 %v159, %v378
    %380 = vdwg.mxu0
    %381 = vmatprep.subr.bf16.mxu0 %v277
    %382 = vmatpush1.bf16.msra.mxu0 %v276
    %383 = vmatprep.subr.bf16.mxu0 %v281
    %384 = vmatpush1.bf16.msra.mxu0 %v280
    %385 = vmatprep.subr.bf16.mxu0 %v285
    %386 = vmatpush1.bf16.msra.mxu0 %v284
    %387 = vmatprep.subr.bf16.mxu0 %v289
    %388 = vmatpush1.bf16.msra.mxu0 %v288
    %389 = vmatprep.subr.bf16.mxu0 %v293
    %390 = vmatpush1.bf16.msra.mxu0 %v292
    %391 = vmatprep.subr.bf16.mxu0 %v297
    %392 = vmatpush1.bf16.msra.mxu0 %v296
    %393 = vmatprep.subr.bf16.mxu0 %v301
    %394 = vmatpush1.bf16.msra.mxu0 %v300
    %395 = vmatprep.subr.bf16.mxu0 %v305
    %396 = vmatpush1.bf16.msra.mxu0 %v304
    %397 = vmatprep.subr.bf16.mxu0 0
    %398 = vmatpush1.bf16.msra.mxu0 0
    %399 = vmatprep.subr.bf16.mxu0 0
    %400 = vmatpush1.bf16.msra.mxu0 0
    %401 = vmatprep.subr.bf16.mxu0 0
    %402 = vmatpush1.bf16.msra.mxu0 0
    %403 = vmatprep.subr.bf16.mxu0 0
    %404 = vmatpush1.bf16.msra.mxu0 0
    %405 = vmatprep.subr.bf16.mxu0 0
    %406 = vmatpush1.bf16.msra.mxu0 0
    %407 = vmatprep.subr.bf16.mxu0 0
    %408 = vmatpush1.bf16.msra.mxu0 0
    %409 = vmatprep.subr.bf16.mxu0 0
    %410 = vmatpush1.bf16.msra.mxu0 0
    %411 = vmatprep.subr.bf16.mxu0 0
    %412 = vmatpush1.bf16.msra.mxu0 0
    %413 = vmatprep.mubr.bf16.mxu0 0
    %414 = vmatmul.mubr.bf16.gmra.mrb[0].mxu0 %v176
    %v415 = vpop.f32.mrb[0].mxu0
    %v416 = vadd.f32 %v163, %v415
    %v417 = vpop.f32.mrb[0].mxu0
    %v418 = vadd.f32 %v167, %v417
    %v419 = vpop.f32.mrb[0].mxu0
    %v420 = vadd.f32 %v163, %v419
    %v421 = vpop.f32.mrb[0].mxu0
    %v422 = vadd.f32 %v167, %v421
    %423 = vdwg.mxu0
    %v424 = vmax.f32 %v373, 0.0
    %v425 = vmax.f32 %v375, 0.0
    %v426 = vmax.f32 %v416, 0.0
    %v427 = vmax.f32 %v418, 0.0
    %v428 = vmax.f32 %v377, 0.0
    %v429 = vmax.f32 %v379, 0.0
    %v430 = vmax.f32 %v420, 0.0
    %v431 = vmax.f32 %v422, 0.0
    %v432 = vpack.c.bf16 %v428, %v424
    %v433 = vpack.c.bf16 %v429, %v425
    %v434 = vpack.c.bf16 %v430, %v426
    %v435 = vpack.c.bf16 %v431, %v427
    %v436 = vld [vmem:[#allocation7] sm:$0xf]
    %v437 = vld [vmem:[#allocation7 + $0x4] sm:$0xf]
    %v438 = vld [vmem:[#allocation7 + $0x8] sm:$0xf]
    %v439 = vld [vmem:[#allocation7 + $0xc] sm:$0xf]
    %v440 = vld [vmem:[#allocation7 + $0x10] sm:$0xf]
    %v441 = vld [vmem:[#allocation7 + $0x14] sm:$0xf]
    %v442 = vld [vmem:[#allocation7 + $0x18] sm:$0xf]
    %v443 = vld [vmem:[#allocation7 + $0x1c] sm:$0xf]
    %v444 = vld [vmem:[#allocation7 + $0x20] sm:$0xf]
    %v445 = vld [vmem:[#allocation7 + $0x24] sm:$0xf]
    %v446 = vld [vmem:[#allocation7 + $0x28] sm:$0xf]
    %v447 = vld [vmem:[#allocation7 + $0x2c] sm:$0xf]
    %v448 = vld [vmem:[#allocation7 + $0x30] sm:$0xf]
    %v449 = vld [vmem:[#allocation7 + $0x34] sm:$0xf]
    %v450 = vld [vmem:[#allocation7 + $0x38] sm:$0xf]
    %v451 = vld [vmem:[#allocation7 + $0x3c] sm:$0xf]
    %v452 = vld [vmem:[#allocation7 + $0x40] sm:$0xf]
    %v453 = vld [vmem:[#allocation7 + $0x44] sm:$0xf]
    %v454 = vld [vmem:[#allocation7 + $0x48] sm:$0xf]
    %v455 = vld [vmem:[#allocation7 + $0x4c] sm:$0xf]
    %v456 = vld [vmem:[#allocation7 + $0x50] sm:$0xf]
    %v457 = vld [vmem:[#allocation7 + $0x54] sm:$0xf]
    %v458 = vld [vmem:[#allocation7 + $0x58] sm:$0xf]
    %v459 = vld [vmem:[#allocation7 + $0x5c] sm:$0xf]
    %v460 = vld [vmem:[#allocation7 + $0x60] sm:$0xf]
    %v461 = vld [vmem:[#allocation7 + $0x64] sm:$0xf]
    %v462 = vld [vmem:[#allocation7 + $0x68] sm:$0xf]
    %v463 = vld [vmem:[#allocation7 + $0x6c] sm:$0xf]
    %v464 = vld [vmem:[#allocation7 + $0x70] sm:$0xf]
    %v465 = vld [vmem:[#allocation7 + $0x74] sm:$0xf]
    %v466 = vld [vmem:[#allocation7 + $0x78] sm:$0xf]
    %v467 = vld [vmem:[#allocation7 + $0x7c] sm:$0xf]
    %v468 = vld [vmem:[%s4] sm:$0x1]
    %v470 = vlaneseq
    %v471 = vshrl.u32 %v470, 7
    %v472 = vsub.s32 0, %v471
    %v473 = vrot.slane %v468, %v472
    %v507 = vunpack.c.l.b16 %v436
    %v508 = vunpack.c.l.b16 %v437
    %v509 = vunpack.c.l.b16 %v438
    %v510 = vunpack.c.l.b16 %v439
    %v511 = vunpack.c.l.b16 %v440
    %v512 = vunpack.c.l.b16 %v441
    %v513 = vunpack.c.l.b16 %v442
    %v514 = vunpack.c.l.b16 %v443
    %v515 = vunpack.c.l.b16 %v444
    %v516 = vunpack.c.l.b16 %v445
    %v517 = vunpack.c.l.b16 %v446
    %v518 = vunpack.c.l.b16 %v447
    %v519 = vunpack.c.l.b16 %v448
    %v520 = vunpack.c.l.b16 %v449
    %v521 = vunpack.c.l.b16 %v450
    %v522 = vunpack.c.l.b16 %v451
    %v523 = vunpack.c.l.b16 %v452
    %v524 = vunpack.c.l.b16 %v453
    %v525 = vunpack.c.l.b16 %v454
    %v526 = vunpack.c.l.b16 %v455
    %v527 = vunpack.c.l.b16 %v456
    %v528 = vunpack.c.l.b16 %v457
    %v529 = vunpack.c.l.b16 %v458
    %v530 = vunpack.c.l.b16 %v459
    %v531 = vunpack.c.l.b16 %v460
    %v532 = vunpack.c.l.b16 %v461
    %v533 = vunpack.c.l.b16 %v462
    %v534 = vunpack.c.l.b16 %v463
    %v535 = vunpack.c.l.b16 %v464
    %v536 = vunpack.c.l.b16 %v465
    %v537 = vunpack.c.l.b16 %v466
    %v538 = vunpack.c.l.b16 %v467
    %v539 = vpack.c.b16 %v508, %v507
    %v540 = vpack.c.b16 %v510, %v509
    %v541 = vpack.c.b16 %v512, %v511
    %v542 = vpack.c.b16 %v514, %v513
    %v543 = vpack.c.b16 %v516, %v515
    %v544 = vpack.c.b16 %v518, %v517
    %v545 = vpack.c.b16 %v520, %v519
    %v546 = vpack.c.b16 %v522, %v521
    %v547 = vpack.c.b16 %v524, %v523
    %v548 = vpack.c.b16 %v526, %v525
    %v549 = vpack.c.b16 %v528, %v527
    %v550 = vpack.c.b16 %v530, %v529
    %v551 = vpack.c.b16 %v532, %v531
    %v552 = vpack.c.b16 %v534, %v533
    %v553 = vpack.c.b16 %v536, %v535
    %v554 = vpack.c.b16 %v538, %v537
    %571 = vmatprep.subr.bf16.mxu0 0
    %572 = vmatpush1.bf16.msra.mxu0 %v539
    %573 = vmatprep.subr.bf16.mxu0 0
    %574 = vmatpush1.bf16.msra.mxu0 %v540
    %575 = vmatprep.subr.bf16.mxu0 0
    %576 = vmatpush1.bf16.msra.mxu0 %v541
    %577 = vmatprep.subr.bf16.mxu0 0
    %578 = vmatpush1.bf16.msra.mxu0 %v542
    %579 = vmatprep.subr.bf16.mxu0 0
    %580 = vmatpush1.bf16.msra.mxu0 %v543
    %581 = vmatprep.subr.bf16.mxu0 0
    %582 = vmatpush1.bf16.msra.mxu0 %v544
    %583 = vmatprep.subr.bf16.mxu0 0
    %584 = vmatpush1.bf16.msra.mxu0 %v545
    %585 = vmatprep.subr.bf16.mxu0 0
    %586 = vmatpush1.bf16.msra.mxu0 %v546
    %587 = vmatprep.subr.bf16.mxu0 0
    %588 = vmatpush1.bf16.msra.mxu0 %v547
    %589 = vmatprep.subr.bf16.mxu0 0
    %590 = vmatpush1.bf16.msra.mxu0 %v548
    %591 = vmatprep.subr.bf16.mxu0 0
    %592 = vmatpush1.bf16.msra.mxu0 %v549
    %593 = vmatprep.subr.bf16.mxu0 0
    %594 = vmatpush1.bf16.msra.mxu0 %v550
    %595 = vmatprep.subr.bf16.mxu0 0
    %596 = vmatpush1.bf16.msra.mxu0 %v551
    %597 = vmatprep.subr.bf16.mxu0 0
    %598 = vmatpush1.bf16.msra.mxu0 %v552
    %599 = vmatprep.subr.bf16.mxu0 0
    %600 = vmatpush1.bf16.msra.mxu0 %v553
    %601 = vmatprep.subr.bf16.mxu0 0
    %602 = vmatpush1.bf16.msra.mxu0 %v554
    %603 = vmatprep.mubr.bf16.mxu0 %v433
    %604 = vmatmul.mubr.bf16.gmra.mrb[0].mxu0 %v432
    %v605 = vpop.f32.mrb[0].mxu0
    %v606 = vadd.f32 %v473, %v605
    %v607 = vpop.f32.mrb[0].mxu0
    %v608 = vpop.f32.mrb[0].mxu0
    %v609 = vadd.f32 %v473, %v608
    %v610 = vpop.f32.mrb[0].mxu0
    %611 = vdwg.mxu0
    %v612 = vld [vmem:[#allocation8] sm:$0xff]
    %v613 = vld [vmem:[#allocation8 + $0x8] sm:$0xff]
    %v614 = vld [vmem:[#allocation8 + $0x10] sm:$0xff]
    %v615 = vld [vmem:[#allocation8 + $0x18] sm:$0xff]
    %v616 = vld [vmem:[#allocation8 + $0x20] sm:$0xff]
    %v617 = vld [vmem:[#allocation8 + $0x28] sm:$0xff]
    %v618 = vld [vmem:[#allocation8 + $0x30] sm:$0xff]
    %v619 = vld [vmem:[#allocation8 + $0x38] sm:$0xff]
    %v620 = vld [vmem:[#allocation8 + $0x40] sm:$0xff]
    %v621 = vld [vmem:[#allocation8 + $0x48] sm:$0xff]
    %v622 = vld [vmem:[#allocation8 + $0x50] sm:$0xff]
    %v623 = vld [vmem:[#allocation8 + $0x58] sm:$0xff]
    %v624 = vld [vmem:[#allocation8 + $0x60] sm:$0xff]
    %v625 = vld [vmem:[#allocation8 + $0x68] sm:$0xff]
    %v626 = vld [vmem:[#allocation8 + $0x70] sm:$0xff]
    %v627 = vld [vmem:[#allocation8 + $0x78] sm:$0xff]
    %v628 = vld [vmem:[#allocation8 + $0x80] sm:$0xff]
    %v629 = vld [vmem:[#allocation8 + $0x88] sm:$0xff]
    %v630 = vld [vmem:[#allocation8 + $0x90] sm:$0xff]
    %v631 = vld [vmem:[#allocation8 + $0x98] sm:$0xff]
    %v632 = vld [vmem:[#allocation8 + $0xa0] sm:$0xff]
    %v633 = vld [vmem:[#allocation8 + $0xa8] sm:$0xff]
    %v634 = vld [vmem:[#allocation8 + $0xb0] sm:$0xff]
    %v635 = vld [vmem:[#allocation8 + $0xb8] sm:$0xff]
    %v636 = vld [vmem:[#allocation8 + $0xc0] sm:$0xff]
    %v637 = vld [vmem:[#allocation8 + $0xc8] sm:$0xff]
    %v638 = vld [vmem:[#allocation8 + $0xd0] sm:$0xff]
    %v639 = vld [vmem:[#allocation8 + $0xd8] sm:$0xff]
    %v640 = vld [vmem:[#allocation8 + $0xe0] sm:$0xff]
    %v641 = vld [vmem:[#allocation8 + $0xe8] sm:$0xff]
    %v642 = vld [vmem:[#allocation8 + $0xf0] sm:$0xff]
    %v643 = vld [vmem:[#allocation8 + $0xf8] sm:$0xff]
    %v644 = vld [vmem:[%s6] sm:$0x3]
    %v646 = vlaneseq
    %v647 = vshrl.u32 %v646, 7
    %v648 = vsub.s32 0, %v647
    %v649 = vrot.slane %v644, %v648
    %v650 = vlaneseq
    %v651 = vshrl.u32 %v650, 7
    %v652 = vsub.s32 1, %v651
    %v653 = vrot.slane %v644, %v652
    %v688 = vunpack.c.l.b16 %v612
    %v689 = vunpack.c.h.b16 %v612
    %v690 = vunpack.c.l.b16 %v613
    %v691 = vunpack.c.h.b16 %v613
    %v692 = vunpack.c.l.b16 %v614
    %v693 = vunpack.c.h.b16 %v614
    %v694 = vunpack.c.l.b16 %v615
    %v695 = vunpack.c.h.b16 %v615
    %v696 = vunpack.c.l.b16 %v616
    %v697 = vunpack.c.h.b16 %v616
    %v698 = vunpack.c.l.b16 %v617
    %v699 = vunpack.c.h.b16 %v617
    %v700 = vunpack.c.l.b16 %v618
    %v701 = vunpack.c.h.b16 %v618
    %v702 = vunpack.c.l.b16 %v619
    %v703 = vunpack.c.h.b16 %v619
    %v704 = vunpack.c.l.b16 %v620
    %v705 = vunpack.c.h.b16 %v620
    %v706 = vunpack.c.l.b16 %v621
    %v707 = vunpack.c.h.b16 %v621
    %v708 = vunpack.c.l.b16 %v622
    %v709 = vunpack.c.h.b16 %v622
    %v710 = vunpack.c.l.b16 %v623
    %v711 = vunpack.c.h.b16 %v623
    %v712 = vunpack.c.l.b16 %v624
    %v713 = vunpack.c.h.b16 %v624
    %v714 = vunpack.c.l.b16 %v625
    %v715 = vunpack.c.h.b16 %v625
    %v716 = vunpack.c.l.b16 %v626
    %v717 = vunpack.c.h.b16 %v626
    %v718 = vunpack.c.l.b16 %v627
    %v719 = vunpack.c.h.b16 %v627
    %v720 = vunpack.c.l.b16 %v628
    %v721 = vunpack.c.h.b16 %v628
    %v722 = vunpack.c.l.b16 %v629
    %v723 = vunpack.c.h.b16 %v629
    %v724 = vunpack.c.l.b16 %v630
    %v725 = vunpack.c.h.b16 %v630
    %v726 = vunpack.c.l.b16 %v631
    %v727 = vunpack.c.h.b16 %v631
    %v728 = vunpack.c.l.b16 %v632
    %v729 = vunpack.c.h.b16 %v632
    %v730 = vunpack.c.l.b16 %v633
    %v731 = vunpack.c.h.b16 %v633
    %v732 = vunpack.c.l.b16 %v634
    %v733 = vunpack.c.h.b16 %v634
    %v734 = vunpack.c.l.b16 %v635
    %v735 = vunpack.c.h.b16 %v635
    %v736 = vunpack.c.l.b16 %v636
    %v737 = vunpack.c.h.b16 %v636
    %v738 = vunpack.c.l.b16 %v637
    %v739 = vunpack.c.h.b16 %v637
    %v740 = vunpack.c.l.b16 %v638
    %v741 = vunpack.c.h.b16 %v638
    %v742 = vunpack.c.l.b16 %v639
    %v743 = vunpack.c.h.b16 %v639
    %v744 = vunpack.c.l.b16 %v640
    %v745 = vunpack.c.h.b16 %v640
    %v746 = vunpack.c.l.b16 %v641
    %v747 = vunpack.c.h.b16 %v641
    %v748 = vunpack.c.l.b16 %v642
    %v749 = vunpack.c.h.b16 %v642
    %v750 = vunpack.c.l.b16 %v643
    %v751 = vunpack.c.h.b16 %v643
    %v752 = vpack.c.b16 %v690, %v688
    %v753 = vpack.c.b16 %v691, %v689
    %v754 = vpack.c.b16 %v694, %v692
    %v755 = vpack.c.b16 %v695, %v693
    %v756 = vpack.c.b16 %v698, %v696
    %v757 = vpack.c.b16 %v699, %v697
    %v758 = vpack.c.b16 %v702, %v700
    %v759 = vpack.c.b16 %v703, %v701
    %v760 = vpack.c.b16 %v706, %v704
    %v761 = vpack.c.b16 %v707, %v705
    %v762 = vpack.c.b16 %v710, %v708
    %v763 = vpack.c.b16 %v711, %v709
    %v764 = vpack.c.b16 %v714, %v712
    %v765 = vpack.c.b16 %v715, %v713
    %v766 = vpack.c.b16 %v718, %v716
    %v767 = vpack.c.b16 %v719, %v717
    %v768 = vpack.c.b16 %v722, %v720
    %v769 = vpack.c.b16 %v723, %v721
    %v770 = vpack.c.b16 %v726, %v724
    %v771 = vpack.c.b16 %v727, %v725
    %v772 = vpack.c.b16 %v730, %v728
    %v773 = vpack.c.b16 %v731, %v729
    %v774 = vpack.c.b16 %v734, %v732
    %v775 = vpack.c.b16 %v735, %v733
    %v776 = vpack.c.b16 %v738, %v736
    %v777 = vpack.c.b16 %v739, %v737
    %v778 = vpack.c.b16 %v742, %v740
    %v779 = vpack.c.b16 %v743, %v741
    %v780 = vpack.c.b16 %v746, %v744
    %v781 = vpack.c.b16 %v747, %v745
    %v782 = vpack.c.b16 %v750, %v748
    %v783 = vpack.c.b16 %v751, %v749
    %816 = vmatprep.subr.bf16.mxu0 %v753
    %817 = vmatpush1.bf16.msra.mxu0 %v752
    %818 = vmatprep.subr.bf16.mxu0 %v755
    %819 = vmatpush1.bf16.msra.mxu0 %v754
    %820 = vmatprep.subr.bf16.mxu0 %v757
    %821 = vmatpush1.bf16.msra.mxu0 %v756
    %822 = vmatprep.subr.bf16.mxu0 %v759
    %823 = vmatpush1.bf16.msra.mxu0 %v758
    %824 = vmatprep.subr.bf16.mxu0 %v761
    %825 = vmatpush1.bf16.msra.mxu0 %v760
    %826 = vmatprep.subr.bf16.mxu0 %v763
    %827 = vmatpush1.bf16.msra.mxu0 %v762
    %828 = vmatprep.subr.bf16.mxu0 %v765
    %829 = vmatpush1.bf16.msra.mxu0 %v764
    %830 = vmatprep.subr.bf16.mxu0 %v767
    %831 = vmatpush1.bf16.msra.mxu0 %v766
    %832 = vmatprep.subr.bf16.mxu0 %v769
    %833 = vmatpush1.bf16.msra.mxu0 %v768
    %834 = vmatprep.subr.bf16.mxu0 %v771
    %835 = vmatpush1.bf16.msra.mxu0 %v770
    %836 = vmatprep.subr.bf16.mxu0 %v773
    %837 = vmatpush1.bf16.msra.mxu0 %v772
    %838 = vmatprep.subr.bf16.mxu0 %v775
    %839 = vmatpush1.bf16.msra.mxu0 %v774
    %840 = vmatprep.subr.bf16.mxu0 %v777
    %841 = vmatpush1.bf16.msra.mxu0 %v776
    %842 = vmatprep.subr.bf16.mxu0 %v779
    %843 = vmatpush1.bf16.msra.mxu0 %v778
    %844 = vmatprep.subr.bf16.mxu0 %v781
    %845 = vmatpush1.bf16.msra.mxu0 %v780
    %846 = vmatprep.subr.bf16.mxu0 %v783
    %847 = vmatpush1.bf16.msra.mxu0 %v782
    %848 = vmatprep.mubr.bf16.mxu0 %v435
    %849 = vmatmul.mubr.bf16.gmra.mrb[0].mxu0 %v434
    %v850 = vpop.f32.mrb[0].mxu0
    %v851 = vadd.f32 %v649, %v850
    %v852 = vpop.f32.mrb[0].mxu0
    %v853 = vadd.f32 %v653, %v852
    %v854 = vpop.f32.mrb[0].mxu0
    %v855 = vadd.f32 %v649, %v854
    %v856 = vpop.f32.mrb[0].mxu0
    %v857 = vadd.f32 %v653, %v856
    %858 = vdwg.mxu0
    %v859 = vpack.c.bf16 %v855, %v851
    %v860 = vpack.c.bf16 %v857, %v853
    %v861 = vld [vmem:[#allocation11] sm:$0xf]
    %v862 = vld [vmem:[#allocation11 + $0x4] sm:$0xf]
    %v863 = vld [vmem:[#allocation11 + $0x8] sm:$0xf]
    %v864 = vld [vmem:[#allocation11 + $0xc] sm:$0xf]
    %v865 = vld [vmem:[#allocation11 + $0x10] sm:$0xf]
    %v866 = vld [vmem:[#allocation11 + $0x14] sm:$0xf]
    %v867 = vld [vmem:[#allocation11 + $0x18] sm:$0xf]
    %v868 = vld [vmem:[#allocation11 + $0x1c] sm:$0xf]
    %v869 = vld [vmem:[#allocation11 + $0x20] sm:$0xf]
    %v870 = vld [vmem:[#allocation11 + $0x24] sm:$0xf]
    %v871 = vld [vmem:[#allocation11 + $0x28] sm:$0xf]
    %v872 = vld [vmem:[#allocation11 + $0x2c] sm:$0xf]
    %v873 = vld [vmem:[#allocation11 + $0x30] sm:$0xf]
    %v874 = vld [vmem:[#allocation11 + $0x34] sm:$0xf]
    %v875 = vld [vmem:[#allocation11 + $0x38] sm:$0xf]
    %v876 = vld [vmem:[#allocation11 + $0x3c] sm:$0xf]
    %v877 = vld [vmem:[#allocation11 + $0x40] sm:$0xf]
    %v878 = vld [vmem:[#allocation11 + $0x44] sm:$0xf]
    %v879 = vld [vmem:[#allocation11 + $0x48] sm:$0xf]
    %v880 = vld [vmem:[#allocation11 + $0x4c] sm:$0xf]
    %v881 = vld [vmem:[#allocation11 + $0x50] sm:$0xf]
    %v882 = vld [vmem:[#allocation11 + $0x54] sm:$0xf]
    %v883 = vld [vmem:[#allocation11 + $0x58] sm:$0xf]
    %v884 = vld [vmem:[#allocation11 + $0x5c] sm:$0xf]
    %v885 = vld [vmem:[#allocation11 + $0x60] sm:$0xf]
    %v886 = vld [vmem:[#allocation11 + $0x64] sm:$0xf]
    %v887 = vld [vmem:[#allocation11 + $0x68] sm:$0xf]
    %v888 = vld [vmem:[#allocation11 + $0x6c] sm:$0xf]
    %v889 = vld [vmem:[#allocation11 + $0x70] sm:$0xf]
    %v890 = vld [vmem:[#allocation11 + $0x74] sm:$0xf]
    %v891 = vld [vmem:[#allocation11 + $0x78] sm:$0xf]
    %v892 = vld [vmem:[#allocation11 + $0x7c] sm:$0xf]
    %v925 = vunpack.c.l.b16 %v861
    %v926 = vunpack.c.l.b16 %v862
    %v927 = vunpack.c.l.b16 %v863
    %v928 = vunpack.c.l.b16 %v864
    %v929 = vunpack.c.l.b16 %v865
    %v930 = vunpack.c.l.b16 %v866
    %v931 = vunpack.c.l.b16 %v867
    %v932 = vunpack.c.l.b16 %v868
    %v933 = vunpack.c.l.b16 %v869
    %v934 = vunpack.c.l.b16 %v870
    %v935 = vunpack.c.l.b16 %v871
    %v936 = vunpack.c.l.b16 %v872
    %v937 = vunpack.c.l.b16 %v873
    %v938 = vunpack.c.l.b16 %v874
    %v939 = vunpack.c.l.b16 %v875
    %v940 = vunpack.c.l.b16 %v876
    %v941 = vunpack.c.l.b16 %v877
    %v942 = vunpack.c.l.b16 %v878
    %v943 = vunpack.c.l.b16 %v879
    %v944 = vunpack.c.l.b16 %v880
    %v945 = vunpack.c.l.b16 %v881
    %v946 = vunpack.c.l.b16 %v882
    %v947 = vunpack.c.l.b16 %v883
    %v948 = vunpack.c.l.b16 %v884
    %v949 = vunpack.c.l.b16 %v885
    %v950 = vunpack.c.l.b16 %v886
    %v951 = vunpack.c.l.b16 %v887
    %v952 = vunpack.c.l.b16 %v888
    %v953 = vunpack.c.l.b16 %v889
    %v954 = vunpack.c.l.b16 %v890
    %v955 = vunpack.c.l.b16 %v891
    %v956 = vunpack.c.l.b16 %v892
    %v957 = vpack.c.b16 %v926, %v925
    %v958 = vpack.c.b16 %v928, %v927
    %v959 = vpack.c.b16 %v930, %v929
    %v960 = vpack.c.b16 %v932, %v931
    %v961 = vpack.c.b16 %v934, %v933
    %v962 = vpack.c.b16 %v936, %v935
    %v963 = vpack.c.b16 %v938, %v937
    %v964 = vpack.c.b16 %v940, %v939
    %v965 = vpack.c.b16 %v942, %v941
    %v966 = vpack.c.b16 %v944, %v943
    %v967 = vpack.c.b16 %v946, %v945
    %v968 = vpack.c.b16 %v948, %v947
    %v969 = vpack.c.b16 %v950, %v949
    %v970 = vpack.c.b16 %v952, %v951
    %v971 = vpack.c.b16 %v954, %v953
    %v972 = vpack.c.b16 %v956, %v955
    %989 = vmatprep.subr.bf16.mxu0 0
    %990 = vmatpush1.bf16.msra.mxu0 %v957
    %991 = vmatprep.subr.bf16.mxu0 0
    %992 = vmatpush1.bf16.msra.mxu0 %v958
    %993 = vmatprep.subr.bf16.mxu0 0
    %994 = vmatpush1.bf16.msra.mxu0 %v959
    %995 = vmatprep.subr.bf16.mxu0 0
    %996 = vmatpush1.bf16.msra.mxu0 %v960
    %997 = vmatprep.subr.bf16.mxu0 0
    %998 = vmatpush1.bf16.msra.mxu0 %v961
    %999 = vmatprep.subr.bf16.mxu0 0
    %1000 = vmatpush1.bf16.msra.mxu0 %v962
    %1001 = vmatprep.subr.bf16.mxu0 0
    %1002 = vmatpush1.bf16.msra.mxu0 %v963
    %1003 = vmatprep.subr.bf16.mxu0 0
    %1004 = vmatpush1.bf16.msra.mxu0 %v964
    %1005 = vmatprep.subr.bf16.mxu0 0
    %1006 = vmatpush1.bf16.msra.mxu0 %v965
    %1007 = vmatprep.subr.bf16.mxu0 0
    %1008 = vmatpush1.bf16.msra.mxu0 %v966
    %1009 = vmatprep.subr.bf16.mxu0 0
    %1010 = vmatpush1.bf16.msra.mxu0 %v967
    %1011 = vmatprep.subr.bf16.mxu0 0
    %1012 = vmatpush1.bf16.msra.mxu0 %v968
    %1013 = vmatprep.subr.bf16.mxu0 0
    %1014 = vmatpush1.bf16.msra.mxu0 %v969
    %1015 = vmatprep.subr.bf16.mxu0 0
    %1016 = vmatpush1.bf16.msra.mxu0 %v970
    %1017 = vmatprep.subr.bf16.mxu0 0
    %1018 = vmatpush1.bf16.msra.mxu0 %v971
    %1019 = vmatprep.subr.bf16.mxu0 0
    %1020 = vmatpush1.bf16.msra.mxu0 %v972
    %1021 = vmatprep.mubr.bf16.mxu0 %v860
    %1022 = vmatmul.mubr.bf16.gmra.mrb[0].mxu0 %v859
    %v1023 = vpop.f32.mrb[0].mxu0
    %v1024 = vadd.f32 0.0, %v1023
    %v1025 = vpop.f32.mrb[0].mxu0
    %v1026 = vpop.f32.mrb[0].mxu0
    %v1027 = vadd.f32 0.0, %v1026
    %v1028 = vpop.f32.mrb[0].mxu0
    %1029 = vdwg.mxu0
    %v1030 = vmul.f32 %v1024, 0.2
    %v1031 = vmul.f32 %v1027, 0.2
    %v1032 = vsub.f32 %v606, %v1030
    %v1033 = vsub.f32 %v609, %v1031
    %v1034 = vpack.c.bf16 %v1033, %v1032
    %v1035 = vld [vmem:[#allocation10] sm:$0xff]
    %v1036 = vld [vmem:[#allocation10 + $0x8] sm:$0xff]
    %v1037 = vld [vmem:[#allocation10 + $0x10] sm:$0xff]
    %v1038 = vld [vmem:[#allocation10 + $0x18] sm:$0xff]
    %v1039 = vld [vmem:[#allocation10 + $0x20] sm:$0xff]
    %v1040 = vld [vmem:[#allocation10 + $0x28] sm:$0xff]
    %v1041 = vld [vmem:[#allocation10 + $0x30] sm:$0xff]
    %v1042 = vld [vmem:[#allocation10 + $0x38] sm:$0xff]
    %v1043 = vld [vmem:[#allocation10 + $0x40] sm:$0xff]
    %v1044 = vld [vmem:[#allocation10 + $0x48] sm:$0xff]
    %v1045 = vld [vmem:[#allocation10 + $0x50] sm:$0xff]
    %v1046 = vld [vmem:[#allocation10 + $0x58] sm:$0xff]
    %v1047 = vld [vmem:[#allocation10 + $0x60] sm:$0xff]
    %v1048 = vld [vmem:[#allocation10 + $0x68] sm:$0xff]
    %v1049 = vld [vmem:[#allocation10 + $0x70] sm:$0xff]
    %v1050 = vld [vmem:[#allocation10 + $0x78] sm:$0xff]
    %v1067 = vunpack.c.l.b16 %v1035
    %v1068 = vunpack.c.h.b16 %v1035
    %v1069 = vunpack.c.l.b16 %v1036
    %v1070 = vunpack.c.h.b16 %v1036
    %v1071 = vunpack.c.l.b16 %v1037
    %v1072 = vunpack.c.h.b16 %v1037
    %v1073 = vunpack.c.l.b16 %v1038
    %v1074 = vunpack.c.h.b16 %v1038
    %v1075 = vunpack.c.l.b16 %v1039
    %v1076 = vunpack.c.h.b16 %v1039
    %v1077 = vunpack.c.l.b16 %v1040
    %v1078 = vunpack.c.h.b16 %v1040
    %v1079 = vunpack.c.l.b16 %v1041
    %v1080 = vunpack.c.h.b16 %v1041
    %v1081 = vunpack.c.l.b16 %v1042
    %v1082 = vunpack.c.h.b16 %v1042
    %v1083 = vunpack.c.l.b16 %v1043
    %v1084 = vunpack.c.h.b16 %v1043
    %v1085 = vunpack.c.l.b16 %v1044
    %v1086 = vunpack.c.h.b16 %v1044
    %v1087 = vunpack.c.l.b16 %v1045
    %v1088 = vunpack.c.h.b16 %v1045
    %v1089 = vunpack.c.l.b16 %v1046
    %v1090 = vunpack.c.h.b16 %v1046
    %v1091 = vunpack.c.l.b16 %v1047
    %v1092 = vunpack.c.h.b16 %v1047
    %v1093 = vunpack.c.l.b16 %v1048
    %v1094 = vunpack.c.h.b16 %v1048
    %v1095 = vunpack.c.l.b16 %v1049
    %v1096 = vunpack.c.h.b16 %v1049
    %v1097 = vunpack.c.l.b16 %v1050
    %v1098 = vunpack.c.h.b16 %v1050
    %v1099 = vpack.c.b16 %v1069, %v1067
    %v1100 = vpack.c.b16 %v1070, %v1068
    %v1101 = vpack.c.b16 %v1073, %v1071
    %v1102 = vpack.c.b16 %v1074, %v1072
    %v1103 = vpack.c.b16 %v1077, %v1075
    %v1104 = vpack.c.b16 %v1078, %v1076
    %v1105 = vpack.c.b16 %v1081, %v1079
    %v1106 = vpack.c.b16 %v1082, %v1080
    %v1107 = vpack.c.b16 %v1085, %v1083
    %v1108 = vpack.c.b16 %v1086, %v1084
    %v1109 = vpack.c.b16 %v1089, %v1087
    %v1110 = vpack.c.b16 %v1090, %v1088
    %v1111 = vpack.c.b16 %v1093, %v1091
    %v1112 = vpack.c.b16 %v1094, %v1092
    %v1113 = vpack.c.b16 %v1097, %v1095
    %v1114 = vpack.c.b16 %v1098, %v1096
    %1131 = vmatprep.subr.bf16.mxu0 %v1100
    %1132 = vmatpush1.bf16.msra.mxu0 %v1099
    %1133 = vmatprep.subr.bf16.mxu0 %v1102
    %1134 = vmatpush1.bf16.msra.mxu0 %v1101
    %1135 = vmatprep.subr.bf16.mxu0 %v1104
    %1136 = vmatpush1.bf16.msra.mxu0 %v1103
    %1137 = vmatprep.subr.bf16.mxu0 %v1106
    %1138 = vmatpush1.bf16.msra.mxu0 %v1105
    %1139 = vmatprep.subr.bf16.mxu0 %v1108
    %1140 = vmatpush1.bf16.msra.mxu0 %v1107
    %1141 = vmatprep.subr.bf16.mxu0 %v1110
    %1142 = vmatpush1.bf16.msra.mxu0 %v1109
    %1143 = vmatprep.subr.bf16.mxu0 %v1112
    %1144 = vmatpush1.bf16.msra.mxu0 %v1111
    %1145 = vmatprep.subr.bf16.mxu0 %v1114
    %1146 = vmatpush1.bf16.msra.mxu0 %v1113
    %1147 = vmatprep.subr.bf16.mxu0 0
    %1148 = vmatpush1.bf16.msra.mxu0 0
    %1149 = vmatprep.subr.bf16.mxu0 0
    %1150 = vmatpush1.bf16.msra.mxu0 0
    %1151 = vmatprep.subr.bf16.mxu0 0
    %1152 = vmatpush1.bf16.msra.mxu0 0
    %1153 = vmatprep.subr.bf16.mxu0 0
    %1154 = vmatpush1.bf16.msra.mxu0 0
    %1155 = vmatprep.subr.bf16.mxu0 0
    %1156 = vmatpush1.bf16.msra.mxu0 0
    %1157 = vmatprep.subr.bf16.mxu0 0
    %1158 = vmatpush1.bf16.msra.mxu0 0
    %1159 = vmatprep.subr.bf16.mxu0 0
    %1160 = vmatpush1.bf16.msra.mxu0 0
    %1161 = vmatprep.subr.bf16.mxu0 0
    %1162 = vmatpush1.bf16.msra.mxu0 0
    %1163 = vmatprep.mubr.bf16.mxu0 0
    %1164 = vmatmul.mubr.bf16.gmra.mrb[0].mxu0 %v1034
    %v1165 = vpop.f32.mrb[0].mxu0
    %v1166 = vadd.f32 0.0, %v1165
    %v1167 = vpop.f32.mrb[0].mxu0
    %v1168 = vadd.f32 0.0, %v1167
    %v1169 = vpop.f32.mrb[0].mxu0
    %v1170 = vadd.f32 0.0, %v1169
    %v1171 = vpop.f32.mrb[0].mxu0
    %v1172 = vadd.f32 0.0, %v1171
    %1173 = vdwg.mxu0
    %v1174 = vadd.f32 %v851, %v1166
    %v1175 = vadd.f32 %v853, %v1168
    %v1176 = vadd.f32 %v855, %v1170
    %v1177 = vadd.f32 %v857, %v1172
    %1178 = vst [vmem:[#allocation13] sm:$0xff] %v1174
    %1179 = vst [vmem:[#allocation13 + $0x8] sm:$0xff] %v1175
    %1180 = vst [vmem:[#allocation13 + $0x10] sm:$0xff] %v1176
    %1181 = vst [vmem:[#allocation13 + $0x18] sm:$0xff] %v1177
    // Predicated region
    $region62: #{tpu_custom_call.1} parent=1 // pred_check
      _
    $region63: #{tpu_custom_call.1} parent=1 // pred_check_branch
      %1183 = sbr.rel (0) target = $region65
    $region64: #{tpu_custom_call.1} parent=1 // pred_region
      %s1185 = ssub.s32 512, 512
      %1186 = vsyncadd [#allocation4], %s1185
      %s1187 = sshll.u32 [#allocation13], 4
      %s1188 = int_to_ptr.vmem [resolvable:$true] %s1187
      %1193 = dma.vmem_to_hbm [thread:$0]  %s1188, 512, %s9, [#allocation4], 256, 256, 16
    $region65: #{tpu_custom_call.1} parent=1 // pred_fallthru
      _
    // Predicated region
    $region66: #{tpu_custom_call.1} parent=1 // pred_check
      _
    $region67: #{tpu_custom_call.1} parent=1 // pred_check_branch
      %1195 = sbr.rel (0) target = $region69
    $region68: #{tpu_custom_call.1} parent=1 // pred_region
      %1196 = dma.done [#allocation4], 512
    $region69: #{tpu_custom_call.1} parent=1 // pred_fallthru
      _
    %1197 = vsyncpa [#allocation3], 1
    %1198 = vsyncpa [#allocation6], 1
    %1199 = vsyncpa [#allocation9], 1
    %1200 = vsyncpa [#allocation12], 1
    %1201 = vsyncpa [#allocation4], 1

</llo_original>
